<compile_context>
chip_gen: v5e
topology: v5e:2x2
jax: 0.10.0
libtpu: 0.0.40
codegen_flags: <defaults>
</compile_context>

<pallas_src>
import jax
import jax.numpy as jnp
from jax.experimental import pallas as pl
from jax.experimental.pallas import tpu as pltpu

_MXU_DTYPE = jnp.bfloat16

# Single-buffer grid-invariant weight blocks only once they are large enough to
# matter for the VMEM budget (~18*D^2 bytes >= 4 MiB  <=>  D >~ 480).
_CONST_SINGLE_BUF_MIN_BYTES = 4 * 1024 * 1024


def _probe_buffered():
    if not hasattr(pl, "Buffered"):
        return False
    try:
        pl.BlockSpec((8, 128), lambda b: (0, 0), pipeline_mode=pl.Buffered(1))
        return True
    except Exception:  # older JAX without BlockSpec.pipeline_mode
        return False


_HAS_BUFFERED = _probe_buffered()


def _tpu_budget():
    """(tensorcores to spread the grid over, VMEM tiling budget, vmem limit)."""
    kind = ""
    try:
        kind = (jax.devices()[0].device_kind or "").lower()
    except Exception:
        pass
    if "v7" in kind or "7x" in kind:
        # v7x: 2 TensorCores/chip, 64 MiB VMEM per TC -> keep headroom.
        return 2, 44 * 1024 * 1024, 48 * 1024 * 1024
    # v4/v5p megacore: 2 TCs; v5e/v6e: 1 TC.  All have 128 MiB VMEM.
    cores = 2 if ("v4" in kind or "v5p" in kind) else 1
    return cores, 88 * 1024 * 1024, 96 * 1024 * 1024


def _pick_block_b(batch, n_nodes, state_dim, s_bytes, const_foot, num_cores,
                  vmem_budget):
    """Largest batch block whose double-buffered working set fits the budget,
    while leaving >= num_cores grid steps so every TensorCore gets work."""
    def footprint(bb):
        return (2 * bb * n_nodes * n_nodes * s_bytes      # supports, 2 buffers
                + 4 * bb * n_nodes * state_dim * 4        # x + out blocks, 2 buffers
                + 14 * bb * n_nodes * state_dim * 4       # f32 intermediates
                + const_foot)                             # fused weights/biases
    cap = batch if num_cores <= 1 else max(1, batch // num_cores)
    best = 1
    for cand in range(1, cap + 1):
        if batch % cand == 0 and footprint(cand) <= vmem_budget:
            best = cand
    return best


def _const_spec(shape, single_buffer):
    """BlockSpec for grid-invariant operands (constant index map).  When they
    are large, request a single pipeline buffer: the block is never re-fetched,
    so default double-buffering would waste their full footprint again."""
    index_map = lambda b: (0,) * len(shape)
    if single_buffer and _HAS_BUFFERED:
        return pl.BlockSpec(shape, index_map, pipeline_mode=pl.Buffered(1))
    return pl.BlockSpec(shape, index_map)


def _propagator_kernel(x_ref, s_ref, w_io_ref, w_x_ref, w_rx_ref,
                       b_rz_ref, b_t_ref, o_ref):
    """One GGNN/GRU propagation step for a block of `Bb` graphs.

    x_ref : (Bb, N, D) f32, or lane-dense packed (Bb, N*D) f32 when D < 128
    s_ref : (Bb, N, N) supports (bf16 preferred; f32 is cast in-kernel)
    w_io  : (2D, 3D) bf16  rows [0:D)=a_in, [D:2D)=a_out; cols fused [r | z | t]
    w_x   : (D, 2D) bf16   x's weights for [r | z]
    w_rx  : (D, D)  bf16   (r*x)'s weight for t
    b_rz  : (1, 2D) f32,  b_t : (1, D) f32
    o_ref : same shape/dtype as x_ref
    """
    Bb, N, _ = s_ref.shape
    D = w_rx_ref.shape[0]
    lane_dense = len(x_ref.shape) == 2          # packed (Bb, N*D) layout

    x_f32 = x_ref[...].astype(jnp.float32)
    if lane_dense:
        # HBM-facing load above was 128-lane dense; unpack locally in VMEM.
        x_f32 = x_f32.reshape(Bb, N, D)
    x_mx = x_f32.astype(_MXU_DTYPE)

    s = s_ref[...]
    if s.dtype != _MXU_DTYPE:
        s = s.astype(_MXU_DTYPE)                # one-shot path: cast in-kernel

    M = Bb * N
    if Bb == 1:
        s2, xb = s[0], x_mx[0]
        # a_in = S @ x ; a_out = S^T @ x, contracting S's first node axis
        # directly (MXU consumes the transposed LHS; no (N, N) vxpose tile).
        a_in2 = jnp.dot(s2, xb, preferred_element_type=jnp.float32)
        a_out2 = jax.lax.dot_general(s2, xb, (((0,), (0,)), ((), ())),
                                     preferred_element_type=jnp.float32)
    else:
        a_in2 = jax.lax.dot_general(
            s, x_mx, (((2,), (1,)), ((0,), (0,))),
            preferred_element_type=jnp.float32).reshape(M, D)
        a_out2 = jax.lax.dot_general(
            s, x_mx, (((1,), (1,)), ((0,), (0,))),
            preferred_element_type=jnp.float32).reshape(M, D)

    x2f = x_f32.reshape(M, D)                   # leading-dim merge only (free)
    x2 = x_mx.reshape(M, D)
    a_in2 = a_in2.astype(_MXU_DTYPE)
    a_out2 = a_out2.astype(_MXU_DTYPE)

    w_io = w_io_ref[...]
    if D % 128 == 0 and D < 256:
        # K-fused gate matmul: one (M, 2D) @ (2D, 3D) dot.  The lane concat is
        # 128-aligned so it costs no relayout, and the doubled K keeps the
        # 256x256 MXU fed at small D.
        a_io = jnp.concatenate([a_in2, a_out2], axis=-1)
        acc = jnp.dot(a_io, w_io, preferred_element_type=jnp.float32)
    else:
        acc = jnp.dot(a_in2, w_io[:D], preferred_element_type=jnp.float32)
        acc = acc + jnp.dot(a_out2, w_io[D:], preferred_element_type=jnp.float32)

    # acc columns: [0:D) reset, [D:2D) update, [2D:3D) transform contributions.
    rz = acc[:, :2 * D] + jnp.dot(x2, w_x_ref[...],
                                  preferred_element_type=jnp.float32)
    rz = jax.nn.sigmoid(rz + b_rz_ref[...])
    r = rz[:, :D]
    z = rz[:, D:]

    h_pre = acc[:, 2 * D:] + jnp.dot((r * x2f).astype(_MXU_DTYPE), w_rx_ref[...],
                                     preferred_element_type=jnp.float32)
    h_hat = jnp.tanh(h_pre + b_t_ref[...])

    out = x2f + z * (h_hat - x2f)               # == (1 - z) * x + z * h_hat
    if lane_dense:
        o_ref[...] = out.reshape(Bb, N * D).astype(o_ref.dtype)
    else:
        o_ref[...] = out.reshape(Bb, N, D).astype(o_ref.dtype)


def prepare_propagator_weights(params):
    """Fuse/cast the gate weights once; reuse across all n_steps of a GGNN."""
    wr_t, br = params["wr_t"], params["br"]
    wz_t, bz = params["wz_t"], params["bz"]
    wt_t, bt = params["wt_t"], params["bt"]
    D = wr_t.shape[1]
    # Rows of the (3D, D) per-gate weights correspond to cat([a_in, a_out, x]).
    # Fuse the three gates along the output dim and split by operand so each
    # shared operand needs exactly one wide MXU pass inside the kernel.
    w_in = jnp.concatenate([wr_t[:D], wz_t[:D], wt_t[:D]], axis=1)            # (D, 3D)
    w_out = jnp.concatenate([wr_t[D:2 * D], wz_t[D:2 * D], wt_t[D:2 * D]],
                            axis=1)                                           # (D, 3D)
    return {
        "w_io": jnp.concatenate([w_in, w_out], axis=0).astype(_MXU_DTYPE),    # (2D, 3D)
        "w_x": jnp.concatenate([wr_t[2 * D:], wz_t[2 * D:]],
                               axis=1).astype(_MXU_DTYPE),                    # (D, 2D)
        "w_rx": wt_t[2 * D:].astype(_MXU_DTYPE),                              # (D, D)
        "b_rz": jnp.concatenate([br, bz], axis=1).astype(jnp.float32),        # (1, 2D)
        "b_t": bt.astype(jnp.float32),                                        # (1, D)
    }


def prepare_supports(supports):
    """bf16 cast of the dominant B*N*N stream, hoisted out of the step loop."""
    return supports.astype(_MXU_DTYPE)


def propagator_step(x, supports, fused, *, block_b=None, lane_dense=None,
                    supports_buffers=None):
    """One propagation step.  `supports` may be bf16 (prepared once via
    prepare_supports; the cheap path for a multi-step GGNN) or f32 (cast inside
    the kernel; the cheap path for a one-shot call)."""
    B, N, D = x.shape
    assert supports.shape == (B, N, N), (supports.shape, x.shape)

    num_cores, vmem_budget, vmem_limit = _tpu_budget()
    s_bytes = jnp.dtype(supports.dtype).itemsize

    const_bytes = 18 * D * D + 12 * D          # fused bf16 weights + f32 biases
    single_buf_consts = _HAS_BUFFERED and const_bytes >= _CONST_SINGLE_BUF_MIN_BYTES
    const_foot = const_bytes if single_buf_consts else 2 * const_bytes

    if block_b is None:
        block_b = _pick_block_b(B, N, D, s_bytes, const_foot, num_cores,
                                vmem_budget)
    assert B % block_b == 0, (B, block_b)

    if 2 * block_b * N * N * s_bytes + const_foot > vmem_budget:
        # TODO(synk): node-tiled supports (grid over node blocks with an
        # 'arbitrary' reduction axis + f32 VMEM accumulators) for N >~ 2k.
        raise NotImplementedError(
            "supports block exceeds the VMEM budget; node tiling not implemented")

    # Lane-dense I/O: with D < 128 the natural (.., N, D) blocks load/store via
    # masked vld/vst; packing N*D into the lane dim keeps the HBM-facing x/out
    # blocks 128-lane dense (the unpack/pack is a VMEM-local relayout).
    eligible = (D % 128 != 0) and ((N * D) % 128 == 0)
    lane_dense = eligible if lane_dense is None else (bool(lane_dense) and eligible)

    if lane_dense:
        x_in = x.reshape(B, N * D)                      # free on the wrapper side
        data_spec = pl.BlockSpec((block_b, N * D), lambda b: (b, 0))
    else:
        x_in = x
        data_spec = pl.BlockSpec((block_b, N, D), lambda b: (b, 0, 0))

    if supports_buffers is not None and _HAS_BUFFERED:
        # Optional deeper pipelining of the dominant supports stream (e.g. 3 on
        # v5e/v6e if profiles show exposed DMA); default (None) = 2 buffers.
        s_spec = pl.BlockSpec((block_b, N, N), lambda b: (b, 0, 0),
                              pipeline_mode=pl.Buffered(int(supports_buffers)))
    else:
        s_spec = pl.BlockSpec((block_b, N, N), lambda b: (b, 0, 0))

    out = pl.pallas_call(
        _propagator_kernel,
        out_shape=jax.ShapeDtypeStruct(x_in.shape, x.dtype),
        grid=(B // block_b,),
        in_specs=[
            data_spec,                                        # x
            s_spec,                                           # supports
            _const_spec((2 * D, 3 * D), single_buf_consts),   # w_io
            _const_spec((D, 2 * D), single_buf_consts),       # w_x
            _const_spec((D, D), single_buf_consts),           # w_rx
            _const_spec((1, 2 * D), single_buf_consts),       # b_rz
            _const_spec((1, D), single_buf_consts),           # b_t
        ],
        out_specs=data_spec,
        compiler_params=pltpu.CompilerParams(
            dimension_semantics=("parallel",),
            vmem_limit_bytes=vmem_limit),
    )(x_in, supports, fused["w_io"], fused["w_x"], fused["w_rx"],
      fused["b_rz"], fused["b_t"])

    return out.reshape(B, N, D) if lane_dense else out


def propagator_pallas(x, supports, params, **kwargs):
    """One-shot convenience wrapper: fuses the (D^2-sized) weights here and
    passes supports as-is so the bf16 cast happens inside the kernel instead of
    as an extra full pass over the dominant B*N*N stream.  For a multi-step
    GGNN, call prepare_propagator_weights / prepare_supports once and loop over
    propagator_step instead."""
    return propagator_step(x, supports, prepare_propagator_weights(params),
                           **kwargs)


def propagator_ref(x, supports, params, *, mxu_round=False):
    """Pure-JAX mirror of the PyTorch forward.  With mxu_round=True, matmul
    operands are rounded to bf16 first, mirroring the kernel's MXU precision."""
    rd = ((lambda a: a.astype(jnp.bfloat16).astype(jnp.float32))
          if mxu_round else (lambda a: a))
    a_in = jnp.matmul(rd(supports), rd(x))
    a_out = jnp.matmul(jnp.swapaxes(rd(supports), 1, 2), rd(x))
    a = jnp.concatenate((rd(a_in), rd(a_out), rd(x)), axis=2)
    r = jax.nn.sigmoid(a @ rd(params["wr_t"]) + params["br"][0])
    z = jax.nn.sigmoid(a @ rd(params["wz_t"]) + params["bz"][0])
    joined = jnp.concatenate((rd(a_in), rd(a_out), rd(r * x)), axis=2)
    h_hat = jnp.tanh(joined @ rd(params["wt_t"]) + params["bt"][0])
    return (1.0 - z) * x + z * h_hat


def init_params(key, state_dim):
    D = state_dim
    bound = 1.0 / jnp.sqrt(3.0 * D)
    ks = jax.random.split(key, 6)
    u = lambda k, shape: jax.random.uniform(k, shape, jnp.float32, -bound, bound)
    return {
        "wr_t": u(ks[0], (3 * D, D)), "br": u(ks[1], (1, D)),
        "wz_t": u(ks[2], (3 * D, D)), "bz": u(ks[3], (1, D)),
        "wt_t": u(ks[4], (3 * D, D)), "bt": u(ks[5], (1, D)),
    }


if __name__ == "__main__":
    B, N, D = 2, 8, 32   # batch, num_nodes, state_dim

    key = jax.random.PRNGKey(0)
    kx, ks_, kp = jax.random.split(key, 3)
    x = jax.random.normal(kx, (B, N, D), jnp.float32)
    supports = jax.random.normal(ks_, (B, N, N), jnp.float32)
    params = init_params(kp, D)

    # Hoisted, reusable preprocessing (done once per model / per graph, NOT per
    # propagation step): fused bf16 gate weights and bf16 supports.
    fused = prepare_propagator_weights(params)
    s_mx = prepare_supports(supports)

    try:
        # Default path: lane-dense packed (B, N*D) I/O since D = 32 < 128.
        out = jax.block_until_ready(propagator_step(x, s_mx, fused))
        lane_dense_used = True
    except Exception:
        # TODO(synk): this JAX/Mosaic build rejected the packed-I/O relayout;
        # fall back to the plain (B, N, D) block layout.
        lane_dense_used = False
        out = jax.block_until_ready(
            propagator_step(x, s_mx, fused, lane_dense=False))

    ref_mxu = propagator_ref(x, supports, params, mxu_round=True)
    ref_f32 = propagator_ref(x, supports, params)

    assert out.shape == (B, N, D)
    assert bool(jnp.isfinite(out).all())
    # Tight check vs. a reference mirroring the kernel's bf16 MXU operands.
    assert jnp.allclose(out, ref_mxu, atol=1e-2, rtol=1e-2), \
        "mismatch vs bf16-operand reference"
    # Sanity check vs. the full-f32 PyTorch-equivalent reference.
    assert jnp.allclose(out, ref_f32, atol=5e-2, rtol=5e-2), \
        "mismatch vs f32 reference"

    # One-shot convenience path: f32 supports, cast to bf16 inside the kernel.
    out2 = jax.block_until_ready(
        propagator_pallas(x, supports, params, lane_dense=lane_dense_used))
    assert out2.shape == (B, N, D)
    assert jnp.allclose(out2, ref_mxu, atol=1e-2, rtol=1e-2), \
        "one-shot path mismatch vs bf16-operand reference"

    print("KERNEL_OK")
</pallas_src>

<mosaic_0001>
module attributes {stable_mosaic.version = 11 : i64} {
  func.func @_propagator_kernel(%arg0: i32, %arg1: memref<2x256xf32, #tpu.memory_space<vmem>>, %arg2: memref<2x8x8xbf16, #tpu.memory_space<vmem>>, %arg3: memref<64x96xbf16, #tpu.memory_space<vmem>>, %arg4: memref<32x64xbf16, #tpu.memory_space<vmem>>, %arg5: memref<32x32xbf16, #tpu.memory_space<vmem>>, %arg6: memref<1x64xf32, #tpu.memory_space<vmem>>, %arg7: memref<1x32xf32, #tpu.memory_space<vmem>>, %arg8: memref<2x256xf32, #tpu.memory_space<vmem>>) attributes {dimension_semantics = [#tpu.dimension_semantics<parallel>], iteration_bounds = array<i64: 1>, scalar_prefetch = 0 : i64, scratch_operands = 0 : i64, tpu.core_type = #tpu.core_type<tc>, window_params = [{transform_indices = @transform_0, window_bounds = array<i64: 2, 256>}, {transform_indices = @transform_1, window_bounds = array<i64: 2, 8, 8>}, {pipeline_mode = #tpu.pipeline_mode<synchronous>, transform_indices = @transform_2, window_bounds = array<i64: 64, 96>}, {pipeline_mode = #tpu.pipeline_mode<synchronous>, transform_indices = @transform_3, window_bounds = array<i64: 32, 64>}, {pipeline_mode = #tpu.pipeline_mode<synchronous>, transform_indices = @transform_4, window_bounds = array<i64: 32, 32>}, {pipeline_mode = #tpu.pipeline_mode<synchronous>, transform_indices = @transform_5, window_bounds = array<i64: 1, 64>}, {pipeline_mode = #tpu.pipeline_mode<synchronous>, transform_indices = @transform_6, window_bounds = array<i64: 1, 32>}, {transform_indices = @transform_7, window_bounds = array<i64: 2, 256>}]} {
    %c0 = arith.constant 0 : index
    %c0_0 = arith.constant 0 : index
    %0 = vector.load %arg1[%c0, %c0_0] : memref<2x256xf32, #tpu.memory_space<vmem>>, vector<2x256xf32>
    %1 = vector.shape_cast %0 : vector<2x256xf32> to vector<2x8x32xf32>
    %2 = arith.truncf %1 : vector<2x8x32xf32> to vector<2x8x32xbf16>
    %c0_1 = arith.constant 0 : index
    %c0_2 = arith.constant 0 : index
    %c0_3 = arith.constant 0 : index
    %3 = vector.load %arg2[%c0_1, %c0_2, %c0_3] : memref<2x8x8xbf16, #tpu.memory_space<vmem>>, vector<2x8x8xbf16>
    %cst = arith.constant dense<0.000000e+00> : vector<2x8x32xf32>
    %4 = tpu.matmul %3, %2, %cst {dimension_numbers = #tpu.dot_dimension_numbers<[2], [1], [1], [2], [0, 0, 0, 1, 1, 2], [0], [0]>} : vector<2x8x8xbf16>, vector<2x8x32xbf16>, vector<2x8x32xf32> -> vector<2x8x32xf32>
    %5 = vector.shape_cast %4 : vector<2x8x32xf32> to vector<16x32xf32>
    %cst_4 = arith.constant dense<0.000000e+00> : vector<2x8x32xf32>
    %6 = tpu.matmul %3, %2, %cst_4 {dimension_numbers = #tpu.dot_dimension_numbers<[1], [1], [2], [2], [0, 0, 0, 2, 1, 2], [0], [0]>} : vector<2x8x8xbf16>, vector<2x8x32xbf16>, vector<2x8x32xf32> -> vector<2x8x32xf32>
    %7 = vector.shape_cast %6 : vector<2x8x32xf32> to vector<16x32xf32>
    %8 = vector.shape_cast %1 : vector<2x8x32xf32> to vector<16x32xf32>
    %9 = vector.shape_cast %2 : vector<2x8x32xbf16> to vector<16x32xbf16>
    %10 = arith.truncf %5 : vector<16x32xf32> to vector<16x32xbf16>
    %11 = arith.truncf %7 : vector<16x32xf32> to vector<16x32xbf16>
    %c0_5 = arith.constant 0 : index
    %c0_6 = arith.constant 0 : index
    %12 = vector.load %arg3[%c0_5, %c0_6] : memref<64x96xbf16, #tpu.memory_space<vmem>>, vector<64x96xbf16>
    %13 = vector.extract_strided_slice %12 {offsets = [0, 0], sizes = [32, 96], strides = [1, 1]} : vector<64x96xbf16> to vector<32x96xbf16>
    %cst_7 = arith.constant dense<0.000000e+00> : vector<16x96xf32>
    %14 = tpu.matmul %10, %13, %cst_7 {dimension_numbers = #tpu.dot_dimension_numbers<[1], [0], [0], [1], [0, 0, 1, 1], [], []>} : vector<16x32xbf16>, vector<32x96xbf16>, vector<16x96xf32> -> vector<16x96xf32>
    %15 = vector.extract_strided_slice %12 {offsets = [32, 0], sizes = [32, 96], strides = [1, 1]} : vector<64x96xbf16> to vector<32x96xbf16>
    %cst_8 = arith.constant dense<0.000000e+00> : vector<16x96xf32>
    %16 = tpu.matmul %11, %15, %cst_8 {dimension_numbers = #tpu.dot_dimension_numbers<[1], [0], [0], [1], [0, 0, 1, 1], [], []>} : vector<16x32xbf16>, vector<32x96xbf16>, vector<16x96xf32> -> vector<16x96xf32>
    %17 = arith.addf %14, %16 : vector<16x96xf32>
    %18 = vector.extract_strided_slice %17 {offsets = [0, 0], sizes = [16, 64], strides = [1, 1]} : vector<16x96xf32> to vector<16x64xf32>
    %c0_9 = arith.constant 0 : index
    %c0_10 = arith.constant 0 : index
    %19 = vector.load %arg4[%c0_9, %c0_10] : memref<32x64xbf16, #tpu.memory_space<vmem>>, vector<32x64xbf16>
    %cst_11 = arith.constant dense<0.000000e+00> : vector<16x64xf32>
    %20 = tpu.matmul %9, %19, %cst_11 {dimension_numbers = #tpu.dot_dimension_numbers<[1], [0], [0], [1], [0, 0, 1, 1], [], []>} : vector<16x32xbf16>, vector<32x64xbf16>, vector<16x64xf32> -> vector<16x64xf32>
    %21 = arith.addf %18, %20 : vector<16x64xf32>
    %c0_12 = arith.constant 0 : index
    %c0_13 = arith.constant 0 : index
    %22 = vector.load %arg6[%c0_12, %c0_13] : memref<1x64xf32, #tpu.memory_space<vmem>>, vector<1x64xf32>
    %23 = vector.broadcast %22 : vector<1x64xf32> to vector<16x64xf32>
    %24 = arith.addf %21, %23 : vector<16x64xf32>
    %25 = arith.negf %24 : vector<16x64xf32>
    %26 = math.exp %25 : vector<16x64xf32>
    %cst_14 = arith.constant 1.000000e+00 : f32
    %27 = vector.broadcast %cst_14 : f32 to vector<16x64xf32>
    %28 = arith.addf %27, %26 : vector<16x64xf32>
    %29 = arith.divf %27, %28 : vector<16x64xf32>
    %30 = vector.extract_strided_slice %29 {offsets = [0, 0], sizes = [16, 32], strides = [1, 1]} : vector<16x64xf32> to vector<16x32xf32>
    %31 = vector.extract_strided_slice %29 {offsets = [0, 32], sizes = [16, 32], strides = [1, 1]} : vector<16x64xf32> to vector<16x32xf32>
    %32 = vector.extract_strided_slice %17 {offsets = [0, 64], sizes = [16, 32], strides = [1, 1]} : vector<16x96xf32> to vector<16x32xf32>
    %33 = arith.mulf %30, %8 : vector<16x32xf32>
    %34 = arith.truncf %33 : vector<16x32xf32> to vector<16x32xbf16>
    %c0_15 = arith.constant 0 : index
    %c0_16 = arith.constant 0 : index
    %35 = vector.load %arg5[%c0_15, %c0_16] : memref<32x32xbf16, #tpu.memory_space<vmem>>, vector<32x32xbf16>
    %cst_17 = arith.constant dense<0.000000e+00> : vector<16x32xf32>
    %36 = tpu.matmul %34, %35, %cst_17 {dimension_numbers = #tpu.dot_dimension_numbers<[1], [0], [0], [1], [0, 0, 1, 1], [], []>} : vector<16x32xbf16>, vector<32x32xbf16>, vector<16x32xf32> -> vector<16x32xf32>
    %37 = arith.addf %32, %36 : vector<16x32xf32>
    %c0_18 = arith.constant 0 : index
    %c0_19 = arith.constant 0 : index
    %38 = vector.load %arg7[%c0_18, %c0_19] : memref<1x32xf32, #tpu.memory_space<vmem>>, vector<1x32xf32>
    %39 = vector.broadcast %38 : vector<1x32xf32> to vector<16x32xf32>
    %40 = arith.addf %37, %39 : vector<16x32xf32>
    %41 = math.tanh %40 : vector<16x32xf32>
    %42 = arith.subf %41, %8 : vector<16x32xf32>
    %43 = arith.mulf %31, %42 : vector<16x32xf32>
    %44 = arith.addf %8, %43 : vector<16x32xf32>
    %45 = vector.shape_cast %44 : vector<16x32xf32> to vector<2x256xf32>
    %c0_20 = arith.constant 0 : index
    %c0_21 = arith.constant 0 : index
    %46 = vector.load %arg8[%c0_20, %c0_21] : memref<2x256xf32, #tpu.memory_space<vmem>>, vector<2x256xf32>
    tpu.vector_store %arg8[%c0_20, %c0_21], %45 {strides = array<i32>} : memref<2x256xf32, #tpu.memory_space<vmem>>, vector<2x256xf32>,
    return
  }
  func.func @transform_0(%arg0: i32) -> (i32, i32) {
    %c0_i32 = arith.constant 0 : i32
    %c0_i32_0 = arith.constant 0 : i32
    return %arg0, %c0_i32 : i32, i32
  }
  func.func @transform_1(%arg0: i32) -> (i32, i32, i32) {
    %c0_i32 = arith.constant 0 : i32
    %c0_i32_0 = arith.constant 0 : i32
    %c0_i32_1 = arith.constant 0 : i32
    return %arg0, %c0_i32, %c0_i32_0 : i32, i32, i32
  }
  func.func @transform_2(%arg0: i32) -> (i32, i32) {
    %c0_i32 = arith.constant 0 : i32
    %c0_i32_0 = arith.constant 0 : i32
    %c0_i32_1 = arith.constant 0 : i32
    return %c0_i32, %c0_i32_0 : i32, i32
  }
  func.func @transform_3(%arg0: i32) -> (i32, i32) {
    %c0_i32 = arith.constant 0 : i32
    %c0_i32_0 = arith.constant 0 : i32
    %c0_i32_1 = arith.constant 0 : i32
    return %c0_i32, %c0_i32_0 : i32, i32
  }
  func.func @transform_4(%arg0: i32) -> (i32, i32) {
    %c0_i32 = arith.constant 0 : i32
    %c0_i32_0 = arith.constant 0 : i32
    %c0_i32_1 = arith.constant 0 : i32
    return %c0_i32, %c0_i32_0 : i32, i32
  }
  func.func @transform_5(%arg0: i32) -> (i32, i32) {
    %c0_i32 = arith.constant 0 : i32
    %c0_i32_0 = arith.constant 0 : i32
    %c0_i32_1 = arith.constant 0 : i32
    return %c0_i32, %c0_i32_0 : i32, i32
  }
  func.func @transform_6(%arg0: i32) -> (i32, i32) {
    %c0_i32 = arith.constant 0 : i32
    %c0_i32_0 = arith.constant 0 : i32
    %c0_i32_1 = arith.constant 0 : i32
    return %c0_i32, %c0_i32_0 : i32, i32
  }
  func.func @transform_7(%arg0: i32) -> (i32, i32) {
    %c0_i32 = arith.constant 0 : i32
    %c0_i32_0 = arith.constant 0 : i32
    return %arg0, %c0_i32 : i32, i32
  }
}

module attributes {stable_mosaic.version = 11 : i64} {
  func.func @_propagator_kernel(%arg0: i32, %arg1: memref<2x8x32xf32, #tpu.memory_space<vmem>>, %arg2: memref<2x8x8xbf16, #tpu.memory_space<vmem>>, %arg3: memref<64x96xbf16, #tpu.memory_space<vmem>>, %arg4: memref<32x64xbf16, #tpu.memory_space<vmem>>, %arg5: memref<32x32xbf16, #tpu.memory_space<vmem>>, %arg6: memref<1x64xf32, #tpu.memory_space<vmem>>, %arg7: memref<1x32xf32, #tpu.memory_space<vmem>>, %arg8: memref<2x8x32xf32, #tpu.memory_space<vmem>>) attributes {dimension_semantics = [#tpu.dimension_semantics<parallel>], iteration_bounds = array<i64: 1>, scalar_prefetch = 0 : i64, scratch_operands = 0 : i64, tpu.core_type = #tpu.core_type<tc>, window_params = [{transform_indices = @transform_0, window_bounds = array<i64: 2, 8, 32>}, {transform_indices = @transform_1, window_bounds = array<i64: 2, 8, 8>}, {pipeline_mode = #tpu.pipeline_mode<synchronous>, transform_indices = @transform_2, window_bounds = array<i64: 64, 96>}, {pipeline_mode = #tpu.pipeline_mode<synchronous>, transform_indices = @transform_3, window_bounds = array<i64: 32, 64>}, {pipeline_mode = #tpu.pipeline_mode<synchronous>, transform_indices = @transform_4, window_bounds = array<i64: 32, 32>}, {pipeline_mode = #tpu.pipeline_mode<synchronous>, transform_indices = @transform_5, window_bounds = array<i64: 1, 64>}, {pipeline_mode = #tpu.pipeline_mode<synchronous>, transform_indices = @transform_6, window_bounds = array<i64: 1, 32>}, {transform_indices = @transform_7, window_bounds = array<i64: 2, 8, 32>}]} {
    %c0 = arith.constant 0 : index
    %c0_0 = arith.constant 0 : index
    %c0_1 = arith.constant 0 : index
    %0 = vector.load %arg1[%c0, %c0_0, %c0_1] : memref<2x8x32xf32, #tpu.memory_space<vmem>>, vector<2x8x32xf32>
    %1 = arith.truncf %0 : vector<2x8x32xf32> to vector<2x8x32xbf16>
    %c0_2 = arith.constant 0 : index
    %c0_3 = arith.constant 0 : index
    %c0_4 = arith.constant 0 : index
    %2 = vector.load %arg2[%c0_2, %c0_3, %c0_4] : memref<2x8x8xbf16, #tpu.memory_space<vmem>>, vector<2x8x8xbf16>
    %cst = arith.constant dense<0.000000e+00> : vector<2x8x32xf32>
    %3 = tpu.matmul %2, %1, %cst {dimension_numbers = #tpu.dot_dimension_numbers<[2], [1], [1], [2], [0, 0, 0, 1, 1, 2], [0], [0]>} : vector<2x8x8xbf16>, vector<2x8x32xbf16>, vector<2x8x32xf32> -> vector<2x8x32xf32>
    %4 = vector.shape_cast %3 : vector<2x8x32xf32> to vector<16x32xf32>
    %cst_5 = arith.constant dense<0.000000e+00> : vector<2x8x32xf32>
    %5 = tpu.matmul %2, %1, %cst_5 {dimension_numbers = #tpu.dot_dimension_numbers<[1], [1], [2], [2], [0, 0, 0, 2, 1, 2], [0], [0]>} : vector<2x8x8xbf16>, vector<2x8x32xbf16>, vector<2x8x32xf32> -> vector<2x8x32xf32>
    %6 = vector.shape_cast %5 : vector<2x8x32xf32> to vector<16x32xf32>
    %7 = vector.shape_cast %0 : vector<2x8x32xf32> to vector<16x32xf32>
    %8 = vector.shape_cast %1 : vector<2x8x32xbf16> to vector<16x32xbf16>
    %9 = arith.truncf %4 : vector<16x32xf32> to vector<16x32xbf16>
    %10 = arith.truncf %6 : vector<16x32xf32> to vector<16x32xbf16>
    %c0_6 = arith.constant 0 : index
    %c0_7 = arith.constant 0 : index
    %11 = vector.load %arg3[%c0_6, %c0_7] : memref<64x96xbf16, #tpu.memory_space<vmem>>, vector<64x96xbf16>
    %12 = vector.extract_strided_slice %11 {offsets = [0, 0], sizes = [32, 96], strides = [1, 1]} : vector<64x96xbf16> to vector<32x96xbf16>
    %cst_8 = arith.constant dense<0.000000e+00> : vector<16x96xf32>
    %13 = tpu.matmul %9, %12, %cst_8 {dimension_numbers = #tpu.dot_dimension_numbers<[1], [0], [0], [1], [0, 0, 1, 1], [], []>} : vector<16x32xbf16>, vector<32x96xbf16>, vector<16x96xf32> -> vector<16x96xf32>
    %14 = vector.extract_strided_slice %11 {offsets = [32, 0], sizes = [32, 96], strides = [1, 1]} : vector<64x96xbf16> to vector<32x96xbf16>
    %cst_9 = arith.constant dense<0.000000e+00> : vector<16x96xf32>
    %15 = tpu.matmul %10, %14, %cst_9 {dimension_numbers = #tpu.dot_dimension_numbers<[1], [0], [0], [1], [0, 0, 1, 1], [], []>} : vector<16x32xbf16>, vector<32x96xbf16>, vector<16x96xf32> -> vector<16x96xf32>
    %16 = arith.addf %13, %15 : vector<16x96xf32>
    %17 = vector.extract_strided_slice %16 {offsets = [0, 0], sizes = [16, 64], strides = [1, 1]} : vector<16x96xf32> to vector<16x64xf32>
    %c0_10 = arith.constant 0 : index
    %c0_11 = arith.constant 0 : index
    %18 = vector.load %arg4[%c0_10, %c0_11] : memref<32x64xbf16, #tpu.memory_space<vmem>>, vector<32x64xbf16>
    %cst_12 = arith.constant dense<0.000000e+00> : vector<16x64xf32>
    %19 = tpu.matmul %8, %18, %cst_12 {dimension_numbers = #tpu.dot_dimension_numbers<[1], [0], [0], [1], [0, 0, 1, 1], [], []>} : vector<16x32xbf16>, vector<32x64xbf16>, vector<16x64xf32> -> vector<16x64xf32>
    %20 = arith.addf %17, %19 : vector<16x64xf32>
    %c0_13 = arith.constant 0 : index
    %c0_14 = arith.constant 0 : index
    %21 = vector.load %arg6[%c0_13, %c0_14] : memref<1x64xf32, #tpu.memory_space<vmem>>, vector<1x64xf32>
    %22 = vector.broadcast %21 : vector<1x64xf32> to vector<16x64xf32>
    %23 = arith.addf %20, %22 : vector<16x64xf32>
    %24 = arith.negf %23 : vector<16x64xf32>
    %25 = math.exp %24 : vector<16x64xf32>
    %cst_15 = arith.constant 1.000000e+00 : f32
    %26 = vector.broadcast %cst_15 : f32 to vector<16x64xf32>
    %27 = arith.addf %26, %25 : vector<16x64xf32>
    %28 = arith.divf %26, %27 : vector<16x64xf32>
    %29 = vector.extract_strided_slice %28 {offsets = [0, 0], sizes = [16, 32], strides = [1, 1]} : vector<16x64xf32> to vector<16x32xf32>
    %30 = vector.extract_strided_slice %28 {offsets = [0, 32], sizes = [16, 32], strides = [1, 1]} : vector<16x64xf32> to vector<16x32xf32>
    %31 = vector.extract_strided_slice %16 {offsets = [0, 64], sizes = [16, 32], strides = [1, 1]} : vector<16x96xf32> to vector<16x32xf32>
    %32 = arith.mulf %29, %7 : vector<16x32xf32>
    %33 = arith.truncf %32 : vector<16x32xf32> to vector<16x32xbf16>
    %c0_16 = arith.constant 0 : index
    %c0_17 = arith.constant 0 : index
    %34 = vector.load %arg5[%c0_16, %c0_17] : memref<32x32xbf16, #tpu.memory_space<vmem>>, vector<32x32xbf16>
    %cst_18 = arith.constant dense<0.000000e+00> : vector<16x32xf32>
    %35 = tpu.matmul %33, %34, %cst_18 {dimension_numbers = #tpu.dot_dimension_numbers<[1], [0], [0], [1], [0, 0, 1, 1], [], []>} : vector<16x32xbf16>, vector<32x32xbf16>, vector<16x32xf32> -> vector<16x32xf32>
    %36 = arith.addf %31, %35 : vector<16x32xf32>
    %c0_19 = arith.constant 0 : index
    %c0_20 = arith.constant 0 : index
    %37 = vector.load %arg7[%c0_19, %c0_20] : memref<1x32xf32, #tpu.memory_space<vmem>>, vector<1x32xf32>
    %38 = vector.broadcast %37 : vector<1x32xf32> to vector<16x32xf32>
    %39 = arith.addf %36, %38 : vector<16x32xf32>
    %40 = math.tanh %39 : vector<16x32xf32>
    %41 = arith.subf %40, %7 : vector<16x32xf32>
    %42 = arith.mulf %30, %41 : vector<16x32xf32>
    %43 = arith.addf %7, %42 : vector<16x32xf32>
    %44 = vector.shape_cast %43 : vector<16x32xf32> to vector<2x8x32xf32>
    %c0_21 = arith.constant 0 : index
    %c0_22 = arith.constant 0 : index
    %c0_23 = arith.constant 0 : index
    %45 = vector.load %arg8[%c0_21, %c0_22, %c0_23] : memref<2x8x32xf32, #tpu.memory_space<vmem>>, vector<2x8x32xf32>
    tpu.vector_store %arg8[%c0_21, %c0_22, %c0_23], %44 {strides = array<i32>} : memref<2x8x32xf32, #tpu.memory_space<vmem>>, vector<2x8x32xf32>,
    return
  }
  func.func @transform_0(%arg0: i32) -> (i32, i32, i32) {
    %c0_i32 = arith.constant 0 : i32
    %c0_i32_0 = arith.constant 0 : i32
    %c0_i32_1 = arith.constant 0 : i32
    return %arg0, %c0_i32, %c0_i32_0 : i32, i32, i32
  }
  func.func @transform_1(%arg0: i32) -> (i32, i32, i32) {
    %c0_i32 = arith.constant 0 : i32
    %c0_i32_0 = arith.constant 0 : i32
    %c0_i32_1 = arith.constant 0 : i32
    return %arg0, %c0_i32, %c0_i32_0 : i32, i32, i32
  }
  func.func @transform_2(%arg0: i32) -> (i32, i32) {
    %c0_i32 = arith.constant 0 : i32
    %c0_i32_0 = arith.constant 0 : i32
    %c0_i32_1 = arith.constant 0 : i32
    return %c0_i32, %c0_i32_0 : i32, i32
  }
  func.func @transform_3(%arg0: i32) -> (i32, i32) {
    %c0_i32 = arith.constant 0 : i32
    %c0_i32_0 = arith.constant 0 : i32
    %c0_i32_1 = arith.constant 0 : i32
    return %c0_i32, %c0_i32_0 : i32, i32
  }
  func.func @transform_4(%arg0: i32) -> (i32, i32) {
    %c0_i32 = arith.constant 0 : i32
    %c0_i32_0 = arith.constant 0 : i32
    %c0_i32_1 = arith.constant 0 : i32
    return %c0_i32, %c0_i32_0 : i32, i32
  }
  func.func @transform_5(%arg0: i32) -> (i32, i32) {
    %c0_i32 = arith.constant 0 : i32
    %c0_i32_0 = arith.constant 0 : i32
    %c0_i32_1 = arith.constant 0 : i32
    return %c0_i32, %c0_i32_0 : i32, i32
  }
  func.func @transform_6(%arg0: i32) -> (i32, i32) {
    %c0_i32 = arith.constant 0 : i32
    %c0_i32_0 = arith.constant 0 : i32
    %c0_i32_1 = arith.constant 0 : i32
    return %c0_i32, %c0_i32_0 : i32, i32
  }
  func.func @transform_7(%arg0: i32) -> (i32, i32, i32) {
    %c0_i32 = arith.constant 0 : i32
    %c0_i32_0 = arith.constant 0 : i32
    %c0_i32_1 = arith.constant 0 : i32
    return %arg0, %c0_i32, %c0_i32_0 : i32, i32, i32
  }
}

</mosaic_0001>

<llo_original>
// kernel: tpu_custom_call.1
$region0: #{tpu_custom_call.1}
  #allocation0 [shape = 'u32[]', space=smem, size = 0x4, offset = 0x4, fixed_abs, tag = 'smem constant byte address 0x4 - core index']
  #allocation1 [shape = 'u32[72,128]{1,0:T(1,128)}', space=vmem, size = 0x9000, scoped, tag = 'internal scratch']
  %s0 = inlined_call_operand.hbm [shape: f32[2,8,32], index: 0, kind: input, shape index: {}]
  %s1 = inlined_call_operand.hbm [shape: bf16[2,8,8], index: 1, kind: input, shape index: {}]
  %s2 = inlined_call_operand.hbm [shape: bf16[64,96], index: 2, kind: input, shape index: {}]
  %s3 = inlined_call_operand.hbm [shape: bf16[32,64], index: 3, kind: input, shape index: {}]
  %s4 = inlined_call_operand.hbm [shape: bf16[32,32], index: 4, kind: input, shape index: {}]
  %s5 = inlined_call_operand.vmem [shape: f32[1,64], index: 5, kind: input, shape index: {}]
  %s6 = inlined_call_operand.vmem [shape: f32[1,32], index: 6, kind: input, shape index: {}]
  %s7 = inlined_call_operand.hbm [shape: f32[2,8,32], index: 7, kind: output, shape index: {}]
  %s8 = sld [smem:[#allocation0]]
  $region58: #{tpu_custom_call.1} parent=0
    _
  %s10 = ssub.s32 1, %s8
  %s11 = scalar_select 0, %s10, %s8
  $region1: #{tpu_custom_call.1} parent=0
    #allocation2 [shape = 'u8[8192]{0}', space=vmem, size = 0x2000, scoped, tag = 'input window, operand 0, single buffered']
    #allocation3 [shape = 's32[1]{0}', space=sflag, size = 0x4, scoped, tag = 'scoped memory for tpu_custom_call.1']
    #allocation4 [shape = 's32[1]{0}', space=sflag, size = 0x4, scoped, tag = 'scoped memory for tpu_custom_call.1']
    #allocation5 [shape = 'u8[4096]{0}', space=vmem, size = 0x1000, scoped, tag = 'input window, operand 1, single buffered']
    #allocation6 [shape = 's32[1]{0}', space=sflag, size = 0x4, scoped, tag = 'scoped memory for tpu_custom_call.1']
    #allocation7 [shape = 'u8[16384]{0}', space=vmem, size = 0x4000, scoped, tag = 'input window, operand 2, single buffered']
    #allocation8 [shape = 'u8[8192]{0}', space=vmem, size = 0x2000, scoped, tag = 'input window, operand 3, single buffered']
    #allocation9 [shape = 's32[1]{0}', space=sflag, size = 0x4, scoped, tag = 'scoped memory for tpu_custom_call.1']
    #allocation10 [shape = 'u8[8192]{0}', space=vmem, size = 0x2000, scoped, tag = 'input window, operand 4, single buffered']
    #allocation11 [shape = 'u8[8192]{0}', space=vmem, size = 0x2000, scoped, tag = 'output window, operand 0, single buffered']
    %12 = vsyncpa [#allocation3], 0
    %13 = vsyncpa [#allocation6], 0
    %14 = vsyncpa [#allocation9], 0
    %15 = vsyncpa [#allocation4], 0
    // Predicated region
    $region2: #{tpu_custom_call.1} parent=1 // pred_check
      _
    $region3: #{tpu_custom_call.1} parent=1 // pred_check_branch
      %17 = sbr.rel (0) target = $region5
    $region4: #{tpu_custom_call.1} parent=1 // pred_region
      %19 = vsyncadd [#allocation3], 0
      %s20 = sshll.u32 %s0, 4
      %s21 = int_to_ptr.hbm [resolvable:$true] %s20
      %s22 = sshll.u32 [#allocation2], 4
      %s23 = int_to_ptr.vmem [resolvable:$true] %s22
      %28 = dma.hbm_to_vmem [thread:$0]  %s21, 256, %s23, [#allocation3], 128, 128, 8
    $region5: #{tpu_custom_call.1} parent=1 // pred_fallthru
      _
    // Predicated region
    $region6: #{tpu_custom_call.1} parent=1 // pred_check
      _
    $region7: #{tpu_custom_call.1} parent=1 // pred_check_branch
      %30 = sbr.rel (0) target = $region9
    $region8: #{tpu_custom_call.1} parent=1 // pred_region
      %32 = vsyncadd [#allocation6], 0
      %s33 = sshll.u32 %s1, 4
      %s34 = int_to_ptr.hbm [resolvable:$true] %s33
      %s35 = sshll.u32 [#allocation5], 4
      %s36 = int_to_ptr.vmem [resolvable:$true] %s35
      %41 = dma.hbm_to_vmem [thread:$0]  %s34, 128, %s36, [#allocation6], 64, 64, 4
    $region9: #{tpu_custom_call.1} parent=1 // pred_fallthru
      _
    // Predicated region
    $region10: #{tpu_custom_call.1} parent=1 // pred_check
      _
    $region11: #{tpu_custom_call.1} parent=1 // pred_check_branch
      %43 = sbr.rel (0) target = $region13
    $region12: #{tpu_custom_call.1} parent=1 // pred_region
      %45 = vsyncadd [#allocation6], 0
      %s46 = sshll.u32 %s2, 4
      %s47 = int_to_ptr.hbm [resolvable:$true] %s46
      %s48 = sshll.u32 [#allocation7], 4
      %s49 = int_to_ptr.vmem [resolvable:$true] %s48
      %54 = dma.hbm_to_vmem [thread:$0]  %s47, 512, %s49, [#allocation6], 64, 64, 4
    $region13: #{tpu_custom_call.1} parent=1 // pred_fallthru
      _
    // Predicated region
    $region14: #{tpu_custom_call.1} parent=1 // pred_check
      _
    $region15: #{tpu_custom_call.1} parent=1 // pred_check_branch
      %56 = sbr.rel (0) target = $region17
    $region16: #{tpu_custom_call.1} parent=1 // pred_region
      %58 = vsyncadd [#allocation9], 0
      %s59 = sshll.u32 %s3, 4
      %s60 = int_to_ptr.hbm [resolvable:$true] %s59
      %s61 = sshll.u32 [#allocation8], 4
      %s62 = int_to_ptr.vmem [resolvable:$true] %s61
      %67 = dma.hbm_to_vmem [thread:$0]  %s60, 256, %s62, [#allocation9], 64, 64, 4
    $region17: #{tpu_custom_call.1} parent=1 // pred_fallthru
      _
    // Predicated region
    $region18: #{tpu_custom_call.1} parent=1 // pred_check
      _
    $region19: #{tpu_custom_call.1} parent=1 // pred_check_branch
      %69 = sbr.rel (0) target = $region21
    $region20: #{tpu_custom_call.1} parent=1 // pred_region
      %71 = vsyncadd [#allocation9], 0
      %s72 = sshll.u32 %s4, 4
      %s73 = int_to_ptr.hbm [resolvable:$true] %s72
      %s74 = sshll.u32 [#allocation10], 4
      %s75 = int_to_ptr.vmem [resolvable:$true] %s74
      %80 = dma.hbm_to_vmem [thread:$0]  %s73, 256, %s75, [#allocation9], 64, 64, 4
    $region21: #{tpu_custom_call.1} parent=1 // pred_fallthru
      _
    // Predicated region
    $region22: #{tpu_custom_call.1} parent=1 // pred_check
      _
    $region23: #{tpu_custom_call.1} parent=1 // pred_check_branch
      %82 = sbr.rel (0) target = $region25
    $region24: #{tpu_custom_call.1} parent=1 // pred_region
      _
    $region25: #{tpu_custom_call.1} parent=1 // pred_fallthru
      _
    // Predicated region
    $region26: #{tpu_custom_call.1} parent=1 // pred_check
      _
    $region27: #{tpu_custom_call.1} parent=1 // pred_check_branch
      %84 = sbr.rel (0) target = $region29
    $region28: #{tpu_custom_call.1} parent=1 // pred_region
      _
    $region29: #{tpu_custom_call.1} parent=1 // pred_fallthru
      _
    // Predicated region
    $region30: #{tpu_custom_call.1} parent=1 // pred_check
      _
    $region31: #{tpu_custom_call.1} parent=1 // pred_check_branch
      %86 = sbr.rel (0) target = $region33
    $region32: #{tpu_custom_call.1} parent=1 // pred_region
      %88 = dma.done [#allocation3], 256
    $region33: #{tpu_custom_call.1} parent=1 // pred_fallthru
      _
    // Predicated region
    $region34: #{tpu_custom_call.1} parent=1 // pred_check
      _
    $region35: #{tpu_custom_call.1} parent=1 // pred_check_branch
      %90 = sbr.rel (0) target = $region37
    $region36: #{tpu_custom_call.1} parent=1 // pred_region
      %92 = dma.done [#allocation6], 128
    $region37: #{tpu_custom_call.1} parent=1 // pred_fallthru
      _
    // Predicated region
    $region38: #{tpu_custom_call.1} parent=1 // pred_check
      _
    $region39: #{tpu_custom_call.1} parent=1 // pred_check_branch
      %94 = sbr.rel (0) target = $region41
    $region40: #{tpu_custom_call.1} parent=1 // pred_region
      %96 = dma.done [#allocation6], 512
    $region41: #{tpu_custom_call.1} parent=1 // pred_fallthru
      _
    // Predicated region
    $region42: #{tpu_custom_call.1} parent=1 // pred_check
      _
    $region43: #{tpu_custom_call.1} parent=1 // pred_check_branch
      %98 = sbr.rel (0) target = $region45
    $region44: #{tpu_custom_call.1} parent=1 // pred_region
      %100 = dma.done [#allocation9], 256
    $region45: #{tpu_custom_call.1} parent=1 // pred_fallthru
      _
    // Predicated region
    $region46: #{tpu_custom_call.1} parent=1 // pred_check
      _
    $region47: #{tpu_custom_call.1} parent=1 // pred_check_branch
      %102 = sbr.rel (0) target = $region49
    $region48: #{tpu_custom_call.1} parent=1 // pred_region
      %104 = dma.done [#allocation9], 256
    $region49: #{tpu_custom_call.1} parent=1 // pred_fallthru
      _
    %v106 = vld [vmem:[#allocation2] sm:$0xff]
    %v107 = vld [vmem:[#allocation2 + $0x8] sm:$0xff]
    %v108 = vpack.c.bf16 %v106, %v106
    %v109 = vpack.c.bf16 %v107, %v107
    %v110 = vld [vmem:[#allocation5] sm:$0xf]
    %v111 = vld [vmem:[#allocation5 + $0x4] sm:$0xf]
    %vm112 = vcmask 64512
    %v114 = vsel %vm112, %v110, 0
    %vm116 = vcmask 1043456
    %v118 = vsel %vm116, %v108, 0
    %120 = vmatpush.bf16.msra.mxu0 0
    %121 = vmatpush.bf16.msra.mxu0 0
    %122 = vmatpush.bf16.msra.mxu0 0
    %123 = vmatpush.bf16.msra.mxu0 0
    %124 = vmatpush.bf16.msra.mxu0 0
    %125 = vmatpush.bf16.msra.mxu0 0
    %126 = vmatpush.bf16.msra.mxu0 0
    %127 = vmatpush.bf16.msra.mxu0 %v118
    %128 = vmatmul.bf16.gmra.mxu0 %v114
    %v129 = vpop.f32.mrf.mxu0
    %v130 = vadd.f32 0.0, %v129
    %v131 = vpop.f32.mrf.mxu0
    %132 = vdwg.mxu0
    %v134 = vsel %vm112, %v111, 0
    %v137 = vsel %vm116, %v109, 0
    %139 = vmatpush.bf16.msra.mxu0 0
    %140 = vmatpush.bf16.msra.mxu0 0
    %141 = vmatpush.bf16.msra.mxu0 0
    %142 = vmatpush.bf16.msra.mxu0 0
    %143 = vmatpush.bf16.msra.mxu0 0
    %144 = vmatpush.bf16.msra.mxu0 0
    %145 = vmatpush.bf16.msra.mxu0 0
    %146 = vmatpush.bf16.msra.mxu0 %v137
    %147 = vmatmul.bf16.gmra.mxu0 %v134
    %v148 = vpop.f32.mrf.mxu0
    %v149 = vadd.f32 0.0, %v148
    %v150 = vpop.f32.mrf.mxu0
    %151 = vdwg.mxu0
    %152 = vxpose.xlu0.c.b16.start [1/8] %v110, 128
    %153 = vxpose.xlu0.c.b16.cont [2/8] 0, 128
    %154 = vxpose.xlu0.c.b16.cont [3/8] 0, 128
    %155 = vxpose.xlu0.c.b16.cont [4/8] 0, 128
    %156 = vxpose.xlu0.c.b16.cont [5/8] 0, 128
    %157 = vxpose.xlu0.c.b16.cont [6/8] 0, 128
    %158 = vxpose.xlu0.c.b16.cont [7/8] 0, 128
    %159 = vxpose.xlu0.c.b16.end [8/8] 0, 128
    %v160 = vpop.trf.xlu0
    %v161 = vpop.trf.xlu0
    %v162 = vpop.trf.xlu0
    %v163 = vpop.trf.xlu0
    %v164 = vpop.trf.xlu0
    %v165 = vpop.trf.xlu0
    %v166 = vpop.trf.xlu0
    %v167 = vpop.trf.xlu0
    %v169 = vsel %vm112, %v160, 0
    %171 = vmatpush.bf16.msra.mxu0 0
    %172 = vmatpush.bf16.msra.mxu0 0
    %173 = vmatpush.bf16.msra.mxu0 0
    %174 = vmatpush.bf16.msra.mxu0 0
    %175 = vmatpush.bf16.msra.mxu0 0
    %176 = vmatpush.bf16.msra.mxu0 0
    %177 = vmatpush.bf16.msra.mxu0 0
    %178 = vmatpush.bf16.msra.mxu0 %v118
    %179 = vmatmul.bf16.gmra.mxu0 %v169
    %v180 = vpop.f32.mrf.mxu0
    %v181 = vadd.f32 0.0, %v180
    %v182 = vpop.f32.mrf.mxu0
    %183 = vdwg.mxu0
    %184 = vxpose.xlu0.c.b16.start [1/8] %v111, 128
    %185 = vxpose.xlu0.c.b16.cont [2/8] 0, 128
    %186 = vxpose.xlu0.c.b16.cont [3/8] 0, 128
    %187 = vxpose.xlu0.c.b16.cont [4/8] 0, 128
    %188 = vxpose.xlu0.c.b16.cont [5/8] 0, 128
    %189 = vxpose.xlu0.c.b16.cont [6/8] 0, 128
    %190 = vxpose.xlu0.c.b16.cont [7/8] 0, 128
    %191 = vxpose.xlu0.c.b16.end [8/8] 0, 128
    %v192 = vpop.trf.xlu0
    %v193 = vpop.trf.xlu0
    %v194 = vpop.trf.xlu0
    %v195 = vpop.trf.xlu0
    %v196 = vpop.trf.xlu0
    %v197 = vpop.trf.xlu0
    %v198 = vpop.trf.xlu0
    %v199 = vpop.trf.xlu0
    %v201 = vsel %vm112, %v192, 0
    %203 = vmatpush.bf16.msra.mxu0 0
    %204 = vmatpush.bf16.msra.mxu0 0
    %205 = vmatpush.bf16.msra.mxu0 0
    %206 = vmatpush.bf16.msra.mxu0 0
    %207 = vmatpush.bf16.msra.mxu0 0
    %208 = vmatpush.bf16.msra.mxu0 0
    %209 = vmatpush.bf16.msra.mxu0 0
    %210 = vmatpush.bf16.msra.mxu0 %v137
    %211 = vmatmul.bf16.gmra.mxu0 %v201
    %v212 = vpop.f32.mrf.mxu0
    %v213 = vadd.f32 0.0, %v212
    %v214 = vpop.f32.mrf.mxu0
    %215 = vdwg.mxu0
    %v216 = vpack.c.bf16 %v149, %v130
    %v217 = vpack.c.bf16 %v213, %v181
    %v218 = vld [vmem:[#allocation7] sm:$0xf]
    %v219 = vld [vmem:[#allocation7 + $0x4] sm:$0xf]
    %v220 = vld [vmem:[#allocation7 + $0x8] sm:$0xf]
    %v221 = vld [vmem:[#allocation7 + $0xc] sm:$0xf]
    %v222 = vld [vmem:[#allocation7 + $0x10] sm:$0xf]
    %v223 = vld [vmem:[#allocation7 + $0x14] sm:$0xf]
    %v224 = vld [vmem:[#allocation7 + $0x18] sm:$0xf]
    %v225 = vld [vmem:[#allocation7 + $0x1c] sm:$0xf]
    %v230 = vunpack.c.l.b16 %v222
    %v231 = vunpack.c.l.b16 %v223
    %v232 = vunpack.c.l.b16 %v224
    %v233 = vunpack.c.l.b16 %v225
    %v234 = vpack.c.b16 %v231, %v230
    %v235 = vpack.c.b16 %v233, %v232
    %vm238 = vcmask 261120
    %v240 = vsel %vm238, %v217, 0
    %242 = vmatpush.bf16.msra.mxu0 0
    %243 = vmatpush.bf16.msra.mxu0 0
    %244 = vmatpush.bf16.msra.mxu0 0
    %245 = vmatpush.bf16.msra.mxu0 0
    %246 = vmatpush.bf16.msra.mxu0 0
    %247 = vmatpush.bf16.msra.mxu0 0
    %248 = vmatpush.bf16.msra.mxu0 %v235
    %249 = vmatpush.bf16.msra.mxu0 %v234
    %250 = vmatmul.bf16.gmra.mxu0 %v240
    %v251 = vpop.f32.mrf.mxu0
    %v252 = vadd.f32 0.0, %v251
    %v253 = vpop.f32.mrf.mxu0
    %v254 = vadd.f32 0.0, %v253
    %255 = vdwg.mxu0
    %v260 = vunpack.c.l.b16 %v218
    %v261 = vunpack.c.l.b16 %v219
    %v262 = vunpack.c.l.b16 %v220
    %v263 = vunpack.c.l.b16 %v221
    %v264 = vpack.c.b16 %v261, %v260
    %v265 = vpack.c.b16 %v263, %v262
    %v269 = vsel %vm238, %v216, 0
    %271 = vmatpush.bf16.msra.mxu0 0
    %272 = vmatpush.bf16.msra.mxu0 0
    %273 = vmatpush.bf16.msra.mxu0 0
    %274 = vmatpush.bf16.msra.mxu0 0
    %275 = vmatpush.bf16.msra.mxu0 0
    %276 = vmatpush.bf16.msra.mxu0 0
    %277 = vmatpush.bf16.msra.mxu0 %v265
    %278 = vmatpush.bf16.msra.mxu0 %v264
    %279 = vmatmul.bf16.gmra.mxu0 %v269
    %v280 = vpop.f32.mrf.mxu0
    %v281 = vadd.f32 %v252, %v280
    %v282 = vpop.f32.mrf.mxu0
    %v283 = vadd.f32 %v254, %v282
    %284 = vdwg.mxu0
    %v285 = vld [vmem:[#allocation8] sm:$0xf]
    %v286 = vld [vmem:[#allocation8 + $0x4] sm:$0xf]
    %v287 = vld [vmem:[#allocation8 + $0x8] sm:$0xf]
    %v288 = vld [vmem:[#allocation8 + $0xc] sm:$0xf]
    %v291 = vunpack.c.l.b16 %v108
    %v292 = vunpack.c.l.b16 %v109
    %v293 = vpack.c.b16 %v292, %v291
    %v298 = vunpack.c.l.b16 %v285
    %v299 = vunpack.c.l.b16 %v286
    %v300 = vunpack.c.l.b16 %v287
    %v301 = vunpack.c.l.b16 %v288
    %v302 = vpack.c.b16 %v299, %v298
    %v303 = vpack.c.b16 %v301, %v300
    %v307 = vsel %vm238, %v293, 0
    %309 = vmatpush.bf16.msra.mxu0 0
    %310 = vmatpush.bf16.msra.mxu0 0
    %311 = vmatpush.bf16.msra.mxu0 0
    %312 = vmatpush.bf16.msra.mxu0 0
    %313 = vmatpush.bf16.msra.mxu0 0
    %314 = vmatpush.bf16.msra.mxu0 0
    %315 = vmatpush.bf16.msra.mxu0 %v303
    %316 = vmatpush.bf16.msra.mxu0 %v302
    %317 = vmatmul.bf16.gmra.mxu0 %v307
    %v318 = vpop.f32.mrf.mxu0
    %v319 = vadd.f32 0.0, %v318
    %v320 = vpop.f32.mrf.mxu0
    %v321 = vadd.f32 0.0, %v320
    %322 = vdwg.mxu0
    %v323 = vadd.f32 %v281, %v319
    %v324 = vadd.f32 %v283, %v321
    %v325 = vld [vmem:[%s5] sm:$0x1]
    %v327 = vperm.slane %v325, 0
    %v329 = vadd.f32 %v323, %v327
    %v330 = vadd.f32 %v324, %v327
    %v331 = vxor.u32 %v329, 2147483648
    %v332 = vxor.u32 %v330, 2147483648
    %v333 = vmul.f32 %v331, 1.442695
    %v334 = vpow.pop %v333
    %v335 = vmul.f32 %v332, 1.442695
    %v336 = vpow.pop %v335
    %v337 = vadd.f32 %v334, 1.0
    %v338 = vadd.f32 %v336, 1.0
    %v339 = vrcp.pop %v337
    %v340 = vmul.f32 %v337, %v339
    %v341 = vsub.f32 1.0, %v340
    %v342 = vmul.f32 %v339, %v341
    %v343 = vadd.f32 %v339, %v342
    %vm344 = vweird.f32 %v337
    %vm345 = vweird.f32 %v339
    %vm346 = vmor %vm344, %vm345
    %v347 = vsel %vm346, %v339, %v343
    %v348 = vand.u32 2147483647, %v337
    %vm349 = vcmp.eq.f32.partialorder %v348, 8.507059e+37
    %v350 = vand.u32 %v337, 2147483648
    %v351 = vor.u32 1.1754944e-38, %v350
    %v352 = vsel %vm349, %v351, %v347
    %v353 = vmul.f32 1.0, %v352
    %v354 = vrcp.pop %v338
    %v355 = vmul.f32 %v338, %v354
    %v356 = vsub.f32 1.0, %v355
    %v357 = vmul.f32 %v354, %v356
    %v358 = vadd.f32 %v354, %v357
    %vm359 = vweird.f32 %v338
    %vm360 = vweird.f32 %v354
    %vm361 = vmor %vm359, %vm360
    %v362 = vsel %vm361, %v354, %v358
    %v363 = vand.u32 2147483647, %v338
    %vm364 = vcmp.eq.f32.partialorder %v363, 8.507059e+37
    %v365 = vand.u32 %v338, 2147483648
    %v366 = vor.u32 1.1754944e-38, %v365
    %v367 = vsel %vm364, %v366, %v362
    %v368 = vmul.f32 1.0, %v367
    %v369 = vmul.f32 %v353, %v106
    %v370 = vmul.f32 %v368, %v107
    %v371 = vpack.c.bf16 %v370, %v369
    %v372 = vld [vmem:[#allocation10] sm:$0xf]
    %v373 = vld [vmem:[#allocation10 + $0x4] sm:$0xf]
    %v374 = vld [vmem:[#allocation10 + $0x8] sm:$0xf]
    %v375 = vld [vmem:[#allocation10 + $0xc] sm:$0xf]
    %v380 = vunpack.c.l.b16 %v372
    %v381 = vunpack.c.l.b16 %v373
    %v382 = vunpack.c.l.b16 %v374
    %v383 = vunpack.c.l.b16 %v375
    %v384 = vpack.c.b16 %v381, %v380
    %v385 = vpack.c.b16 %v383, %v382
    %v389 = vsel %vm238, %v371, 0
    %391 = vmatpush.bf16.msra.mxu0 0
    %392 = vmatpush.bf16.msra.mxu0 0
    %393 = vmatpush.bf16.msra.mxu0 0
    %394 = vmatpush.bf16.msra.mxu0 0
    %395 = vmatpush.bf16.msra.mxu0 0
    %396 = vmatpush.bf16.msra.mxu0 0
    %397 = vmatpush.bf16.msra.mxu0 %v385
    %398 = vmatpush.bf16.msra.mxu0 %v384
    %399 = vmatmul.bf16.gmra.mxu0 %v389
    %v400 = vpop.f32.mrf.mxu0
    %v401 = vadd.f32 0.0, %v400
    %v402 = vpop.f32.mrf.mxu0
    %v403 = vadd.f32 0.0, %v402
    %404 = vdwg.mxu0
    %407 = vrot.lane.b32.xlu0 %v401, 64
    %v408 = vpop.permute.xlu0 %407
    %409 = vrot.lane.b32.xlu0 %v403, 64
    %v410 = vpop.permute.xlu0 %409
    %v413 = vadd.f32 %v281, %v408
    %v414 = vadd.f32 %v283, %v410
    %v415 = vld [vmem:[%s6] sm:$0x1]
    %v417 = vperm.slane %v415, 0
    %418 = vrot.lane.b32.xlu0 %v417, 64
    %v419 = vpop.permute.xlu0 %418
    %v421 = vadd.f32 %v413, %v419
    %v422 = vadd.f32 %v414, %v419
    %v423 = vtanh.pop %v421
    %v424 = vtanh.pop %v422
    %427 = vrot.lane.b32.xlu0 %v106, 64
    %v428 = vpop.permute.xlu0 %427
    %429 = vrot.lane.b32.xlu0 %v107, 64
    %v430 = vpop.permute.xlu0 %429
    %v433 = vsub.f32 %v423, %v428
    %v434 = vsub.f32 %v424, %v430
    %437 = vrot.lane.b32.xlu0 %v433, 96
    %v438 = vpop.permute.xlu0 %437
    %439 = vrot.lane.b32.xlu0 %v434, 96
    %v440 = vpop.permute.xlu0 %439
    %v443 = vmul.f32 %v353, %v438
    %v444 = vmul.f32 %v368, %v440
    %447 = vrot.lane.b32.xlu0 %v443, 96
    %v448 = vpop.permute.xlu0 %447
    %449 = vrot.lane.b32.xlu0 %v444, 96
    %v450 = vpop.permute.xlu0 %449
    %v453 = vadd.f32 %v106, %v448
    %v454 = vadd.f32 %v107, %v450
    %455 = vst.msk [vmem:[#allocation11] sm:$0xff] %vm238, %v453
    %456 = vst.msk [vmem:[#allocation11 + $0x8] sm:$0xff] %vm238, %v454
    // Predicated region
    $region50: #{tpu_custom_call.1} parent=1 // pred_check
      _
    $region51: #{tpu_custom_call.1} parent=1 // pred_check_branch
      %458 = sbr.rel (0) target = $region53
    $region52: #{tpu_custom_call.1} parent=1 // pred_region
      %460 = vsyncadd [#allocation4], 0
      %s461 = sshll.u32 [#allocation11], 4
      %s462 = int_to_ptr.vmem [resolvable:$true] %s461
      %s463 = sshll.u32 %s7, 4
      %s464 = int_to_ptr.hbm [resolvable:$true] %s463
      %469 = dma.vmem_to_hbm [thread:$0]  %s462, 256, %s464, [#allocation4], 128, 128, 8
    $region53: #{tpu_custom_call.1} parent=1 // pred_fallthru
      _
    // Predicated region
    $region54: #{tpu_custom_call.1} parent=1 // pred_check
      _
    $region55: #{tpu_custom_call.1} parent=1 // pred_check_branch
      %471 = sbr.rel (0) target = $region57
    $region56: #{tpu_custom_call.1} parent=1 // pred_region
      %473 = dma.done [#allocation4], 256
    $region57: #{tpu_custom_call.1} parent=1 // pred_fallthru
      _
    %474 = vsyncpa [#allocation3], 1
    %475 = vsyncpa [#allocation6], 1
    %476 = vsyncpa [#allocation9], 1
    %477 = vsyncpa [#allocation4], 1

</llo_original>
